<compile_context>
chip_gen: v5e
topology: v5e:2x2
jax: 0.10.0
libtpu: 0.0.40
codegen_flags: <defaults>
</compile_context>

<pallas_src>
import jax
import jax.numpy as jnp
from jax.experimental import pallas as pl
from jax.experimental.pallas import tpu as pltpu

EPS = 1e-6                 # nn.PairwiseDistance default eps
_BIG = jnp.float32(1e30)   # score for padded prototype columns (never selected)


def _round_up(x, m):
    return (x + m - 1) // m * m


# ---------------------------------------------------------------------------
# Kernels
# ---------------------------------------------------------------------------
def _som_bmu_kernel(x_ref, w_ref, w2_ref, idx_ref, best_val_ref):
    """Fused distance + running argmin across M tiles (n == 1 path).

    x_ref  : (TB, D)   input tile (resident across the m axis)
    w_ref  : (D, TM)   eps-folded weight tile
    w2_ref : (1, TM)   precomputed ||w - eps||^2 (BIG on padded columns)
    idx_ref: (TB, 1)   int32 output, resident accumulator across the m axis
    best_val_ref: (TB, 1) f32 VMEM scratch, running min score
    """
    m = pl.program_id(1)
    tm = w_ref.shape[1]

    xw = jnp.dot(x_ref[...], w_ref[...], preferred_element_type=jnp.float32)
    scores = w2_ref[...] - 2.0 * xw                               # (TB, TM)

    local_val = jnp.min(scores, axis=1, keepdims=True)            # (TB, 1)
    col = jax.lax.broadcasted_iota(jnp.int32, scores.shape, 1)
    local_idx = jnp.min(jnp.where(scores == local_val, col, tm),
                        axis=1, keepdims=True) + m * tm           # (TB, 1)

    @pl.when(m == 0)
    def _():
        best_val_ref[...] = local_val
        idx_ref[...] = local_idx

    @pl.when(m > 0)
    def _():
        better = local_val < best_val_ref[...]                    # strict: first tile wins ties
        best_val_ref[...] = jnp.where(better, local_val, best_val_ref[...])
        idx_ref[...] = jnp.where(better, local_idx, idx_ref[...])


def _som_scores_kernel(x_ref, w_ref, w2_ref, s_ref):
    """Tiled ranking scores (n > 1 path): s = ||w-eps||^2 - 2 x.(w-eps)."""
    s_ref[...] = w2_ref[...] - 2.0 * jnp.dot(
        x_ref[...], w_ref[...], preferred_element_type=jnp.float32)


# ---------------------------------------------------------------------------
# Wrappers
# ---------------------------------------------------------------------------
def _pick_tiles(B, M, D, itemsize):
    """Tile sizes that respect (8,128) alignment and a conservative VMEM budget."""
    TB = min(256, _round_up(max(B, 1), 8))
    TM = min(512, _round_up(max(M, 1), 128))

    def budget(tb, tm):
        # double-buffered input tiles + output tile + w2 tile + scratch
        return 2 * itemsize * (tb * D + D * tm) + 4 * (tb * tm + tm + 2 * tb)

    limit = 24 << 20   # safe on v5e/v6e (128 MiB) and v7x (64 MiB physical)
    while budget(TB, TM) > limit and TM > 128:
        TM = max(128, _round_up(TM // 2, 128))
    while budget(TB, TM) > limit and TB > 8:
        TB = max(8, _round_up(TB // 2, 8))
    # TODO(synk): very large input_size D would additionally need a K grid
    # axis with an f32 accumulator; not needed for small-D SOMs.
    return TB, TM, budget(TB, TM)


def _prep(x_flat, weight, matmul_dtype):
    """Hoisted preprocessing: eps-fold, ||w-eps||^2, and lane/sublane padding."""
    B, D = x_flat.shape
    Dw, M = weight.shape
    assert D == Dw
    itemsize = jnp.dtype(matmul_dtype).itemsize
    TB, TM, budget = _pick_tiles(B, M, D, itemsize)
    Bp = _round_up(B, TB)
    Mp = _round_up(M, TM)

    w_eps = weight.astype(jnp.float32) - EPS                      # fold "+eps"
    w2 = jnp.sum(w_eps * w_eps, axis=0, keepdims=True)            # (1, M), f32
    w2 = jnp.pad(w2, ((0, 0), (0, Mp - M)), constant_values=_BIG)
    w_eps = jnp.pad(w_eps, ((0, 0), (0, Mp - M)))
    xp = jnp.pad(x_flat.astype(jnp.float32), ((0, Bp - B), (0, 0)))

    xp = xp.astype(matmul_dtype)
    w_eps = w_eps.astype(matmul_dtype)
    vmem_limit = int(min(32 << 20, max(2 * budget, 4 << 20)))
    return xp, w_eps, w2, (B, D, M, Bp, Mp, TB, TM, itemsize, vmem_limit)


def _in_specs(TB, D, TM):
    return [
        pl.BlockSpec((TB, D), lambda b, m: (b, 0)),    # x tile (resident over m)
        pl.BlockSpec((D, TM), lambda b, m: (0, m)),    # eps-folded weight tile
        pl.BlockSpec((1, TM), lambda b, m: (0, m)),    # ||w-eps||^2 tile
    ]


def som_bmu_indices(x_flat, weight, matmul_dtype=jnp.float32):
    """Fused BMU (argmin) kernel: x_flat (B, D), weight (D, M) -> (B,) int32."""
    xp, w_eps, w2, (B, D, M, Bp, Mp, TB, TM, isz, vmem) = _prep(
        x_flat, weight, matmul_dtype)
    nb, nm = Bp // TB, Mp // TM
    idx = pl.pallas_call(
        _som_bmu_kernel,
        out_shape=jax.ShapeDtypeStruct((Bp, 1), jnp.int32),
        grid=(nb, nm),
        in_specs=_in_specs(TB, D, TM),
        out_specs=pl.BlockSpec((TB, 1), lambda b, m: (b, 0)),   # accumulator over m
        scratch_shapes=[pltpu.VMEM((TB, 1), jnp.float32)],
        compiler_params=pltpu.CompilerParams(
            dimension_semantics=("parallel", "arbitrary"),
            vmem_limit_bytes=vmem),
        cost_estimate=pl.CostEstimate(
            flops=2 * Bp * D * Mp,
            transcendentals=0,
            bytes_accessed=isz * (Bp * D + D * Mp) + 4 * (Mp + Bp)),
    )(xp, w_eps, w2)
    return idx[:B, 0]


def som_ranking_scores(x_flat, weight, matmul_dtype=jnp.float32):
    """Tiled ranking-score kernel (for top-n with n > 1): -> (B, M) f32."""
    xp, w_eps, w2, (B, D, M, Bp, Mp, TB, TM, isz, vmem) = _prep(
        x_flat, weight, matmul_dtype)
    nb, nm = Bp // TB, Mp // TM
    scores = pl.pallas_call(
        _som_scores_kernel,
        out_shape=jax.ShapeDtypeStruct((Bp, Mp), jnp.float32),
        grid=(nb, nm),
        in_specs=_in_specs(TB, D, TM),
        out_specs=pl.BlockSpec((TB, TM), lambda b, m: (b, m)),
        compiler_params=pltpu.CompilerParams(
            dimension_semantics=("parallel", "parallel"),
            vmem_limit_bytes=vmem),
        cost_estimate=pl.CostEstimate(
            flops=2 * Bp * D * Mp,
            transcendentals=0,
            bytes_accessed=isz * (Bp * D + D * Mp) + 4 * (Mp + Bp * Mp)),
    )(xp, w_eps, w2)
    return scores[:B, :M]


def make_som_params(input_size, output_size=(10, 10), seed=0):
    """Deterministic synthetic parameters (shapes match the torch __init__)."""
    key = jax.random.PRNGKey(seed)
    M = output_size[0] * output_size[1]
    weight = jax.random.normal(key, (input_size, M), dtype=jnp.float32)
    xs, ys = jnp.meshgrid(
        jnp.arange(output_size[0]), jnp.arange(output_size[1]), indexing="ij")
    locations = jnp.stack(
        [xs.reshape(-1), ys.reshape(-1)], axis=-1).astype(jnp.float32)
    return weight, locations


def som_forward(x, weight, locations, n=1, matmul_dtype=jnp.float32):
    """Equivalent of SOM.forward: returns (bmu_locations (n, B, 2), 0)."""
    B = x.shape[0]
    x_flat = x.reshape(B, -1)
    if n == 1:
        bmu_indexes = som_bmu_indices(x_flat, weight, matmul_dtype)[:, None]  # (B, 1)
    else:
        # TODO(synk): top-n (n>1) selection uses jax.lax.top_k in plain JAX on
        # the kernel's ranking scores; only the n smallest are materialized.
        scores = som_ranking_scores(x_flat, weight, matmul_dtype)             # (B, M)
        _, bmu_indexes = jax.lax.top_k(-scores, n)                            # (B, n)
    bmu_locations = locations[bmu_indexes]                                    # (B, n, 2)
    return jnp.transpose(bmu_locations, (1, 0, 2)), 0                         # (n, B, 2), loss=0


if __name__ == "__main__":
    # Small shapes consistent with the module: batch=2, input (4,4,4) -> D=64,
    # SOM map output_size=(10,10) -> M=100 prototypes.
    B, C, H, W = 2, 4, 4, 4
    input_size = C * H * W
    output_size = (10, 10)

    key = jax.random.PRNGKey(0)
    k_w, k_x = jax.random.split(key)
    weight, locations = make_som_params(input_size, output_size, seed=0)
    x = jax.random.normal(k_x, (B, C, H, W), dtype=jnp.float32)

    # Plain-JAX reference distances for a sanity check.
    x_flat = x.reshape(B, -1)
    diff = x_flat[:, :, None] - weight[None, :, :] + EPS
    ref_d = jnp.sqrt(jnp.sum(diff * diff, axis=1))                # (B, M)
    ref_min = jnp.min(ref_d, axis=1)

    # n == 1 : fused BMU kernel.
    bmu_locs, loss = som_forward(x, weight, locations, n=1)
    bmu_locs = jax.block_until_ready(bmu_locs)
    assert bmu_locs.shape == (1, B, 2), bmu_locs.shape
    assert loss == 0
    got_idx = (bmu_locs[0, :, 0] * output_size[1]
               + bmu_locs[0, :, 1]).astype(jnp.int32)             # (B,)
    got_d = jnp.take_along_axis(ref_d, got_idx[:, None], axis=1)[:, 0]
    assert bool(jnp.all(got_d <= ref_min + 1e-3)), (got_d, ref_min)

    # n == 3 : tiled score kernel + top_k path.
    bmu_locs3, loss3 = som_forward(x, weight, locations, n=3)
    bmu_locs3 = jax.block_until_ready(bmu_locs3)
    assert bmu_locs3.shape == (3, B, 2), bmu_locs3.shape
    assert loss3 == 0

    print("KERNEL_OK")
</pallas_src>

<mosaic_0001>
module attributes {stable_mosaic.version = 11 : i64} {
  func.func @_som_bmu_kernel(%arg0: i32, %arg1: i32, %arg2: memref<8x64xf32, #tpu.memory_space<vmem>>, %arg3: memref<64x128xf32, #tpu.memory_space<vmem>>, %arg4: memref<1x128xf32, #tpu.memory_space<vmem>>, %arg5: memref<8x1xi32, #tpu.memory_space<vmem>>, %arg6: memref<8x1xf32, #tpu.memory_space<vmem>>) attributes {dimension_semantics = [#tpu.dimension_semantics<parallel>, #tpu.dimension_semantics<arbitrary>], iteration_bounds = array<i64: 1, 1>, scalar_prefetch = 0 : i64, scratch_operands = 1 : i64, tpu.core_type = #tpu.core_type<tc>, window_params = [{transform_indices = @transform_0, window_bounds = array<i64: 8, 64>}, {transform_indices = @transform_1, window_bounds = array<i64: 64, 128>}, {transform_indices = @transform_2, window_bounds = array<i64: 1, 128>}, {transform_indices = @transform_3, window_bounds = array<i64: 8, 1>}]} {
    %c0 = arith.constant 0 : index
    %c0_0 = arith.constant 0 : index
    %0 = vector.load %arg2[%c0, %c0_0] : memref<8x64xf32, #tpu.memory_space<vmem>>, vector<8x64xf32>
    %c0_1 = arith.constant 0 : index
    %c0_2 = arith.constant 0 : index
    %1 = vector.load %arg3[%c0_1, %c0_2] : memref<64x128xf32, #tpu.memory_space<vmem>>, vector<64x128xf32>
    %cst = arith.constant dense<0.000000e+00> : vector<8x128xf32>
    %2 = tpu.matmul %0, %1, %cst {dimension_numbers = #tpu.dot_dimension_numbers<[1], [0], [0], [1], [0, 0, 1, 1], [], []>} : vector<8x64xf32>, vector<64x128xf32>, vector<8x128xf32> -> vector<8x128xf32>
    %c0_3 = arith.constant 0 : index
    %c0_4 = arith.constant 0 : index
    %3 = vector.load %arg4[%c0_3, %c0_4] : memref<1x128xf32, #tpu.memory_space<vmem>>, vector<1x128xf32>
    %cst_5 = arith.constant 2.000000e+00 : f32
    %4 = vector.broadcast %cst_5 : f32 to vector<8x128xf32>
    %5 = arith.mulf %4, %2 : vector<8x128xf32>
    %6 = vector.broadcast %3 : vector<1x128xf32> to vector<8x128xf32>
    %7 = arith.subf %6, %5 : vector<8x128xf32>
    %cst_6 = arith.constant dense<0x7F800000> : vector<8xf32>
    %8 = vector.multi_reduction <minimumf>, %7, %cst_6 [1] : vector<8x128xf32> to vector<8xf32>
    %9 = vector.shape_cast %8 : vector<8xf32> to vector<8x1xf32>
    %10 = tpu.iota {dimensions = array<i32: 1>} : vector<8x128xi32>
    %11 = vector.broadcast %9 : vector<8x1xf32> to vector<8x128xf32>
    %12 = arith.cmpf oeq, %7, %11 : vector<8x128xf32>
    %c128_i32 = arith.constant 128 : i32
    %13 = vector.broadcast %c128_i32 : i32 to vector<8x128xi32>
    %14 = arith.select %12, %10, %13 : vector<8x128xi1>, vector<8x128xi32>
    %cst_7 = arith.constant dense<2147483647> : vector<8xi32>
    %15 = vector.multi_reduction <minsi>, %14, %cst_7 [1] : vector<8x128xi32> to vector<8xi32>
    %16 = vector.shape_cast %15 : vector<8xi32> to vector<8x1xi32>
    %c128_i32_8 = arith.constant 128 : i32
    %17 = arith.muli %arg1, %c128_i32_8 : i32
    %18 = vector.broadcast %17 : i32 to vector<8x1xi32>
    %19 = arith.addi %16, %18 : vector<8x1xi32>
    %c0_i32 = arith.constant 0 : i32
    %20 = arith.cmpi eq, %arg1, %c0_i32 : i32
    %21 = arith.extui %20 : i1 to i32
    %c0_i32_9 = arith.constant 0 : i32
    %22 = arith.cmpi ne, %21, %c0_i32_9 : i32
    scf.if %22 {
      %c0_12 = arith.constant 0 : index
      %c0_13 = arith.constant 0 : index
      %26 = vector.load %arg6[%c0_12, %c0_13] : memref<8x1xf32, #tpu.memory_space<vmem>>, vector<8x1xf32>
      tpu.vector_store %arg6[%c0_12, %c0_13], %9 {strides = array<i32>} : memref<8x1xf32, #tpu.memory_space<vmem>>, vector<8x1xf32>,
      %c0_14 = arith.constant 0 : index
      %c0_15 = arith.constant 0 : index
      %27 = vector.load %arg5[%c0_14, %c0_15] : memref<8x1xi32, #tpu.memory_space<vmem>>, vector<8x1xi32>
      tpu.vector_store %arg5[%c0_14, %c0_15], %19 {strides = array<i32>} : memref<8x1xi32, #tpu.memory_space<vmem>>, vector<8x1xi32>,
    } else {
    }
    %c0_i32_10 = arith.constant 0 : i32
    %23 = arith.cmpi sgt, %arg1, %c0_i32_10 : i32
    %24 = arith.extui %23 : i1 to i32
    %c0_i32_11 = arith.constant 0 : i32
    %25 = arith.cmpi ne, %24, %c0_i32_11 : i32
    scf.if %25 {
      %c0_12 = arith.constant 0 : index
      %c0_13 = arith.constant 0 : index
      %26 = vector.load %arg6[%c0_12, %c0_13] : memref<8x1xf32, #tpu.memory_space<vmem>>, vector<8x1xf32>
      %27 = arith.cmpf olt, %9, %26 : vector<8x1xf32>
      %c0_14 = arith.constant 0 : index
      %c0_15 = arith.constant 0 : index
      %28 = vector.load %arg6[%c0_14, %c0_15] : memref<8x1xf32, #tpu.memory_space<vmem>>, vector<8x1xf32>
      %29 = arith.select %27, %9, %28 : vector<8x1xi1>, vector<8x1xf32>
      %c0_16 = arith.constant 0 : index
      %c0_17 = arith.constant 0 : index
      %30 = vector.load %arg6[%c0_16, %c0_17] : memref<8x1xf32, #tpu.memory_space<vmem>>, vector<8x1xf32>
      tpu.vector_store %arg6[%c0_16, %c0_17], %29 {strides = array<i32>} : memref<8x1xf32, #tpu.memory_space<vmem>>, vector<8x1xf32>,
      %c0_18 = arith.constant 0 : index
      %c0_19 = arith.constant 0 : index
      %31 = vector.load %arg5[%c0_18, %c0_19] : memref<8x1xi32, #tpu.memory_space<vmem>>, vector<8x1xi32>
      %32 = arith.select %27, %19, %31 : vector<8x1xi1>, vector<8x1xi32>
      %c0_20 = arith.constant 0 : index
      %c0_21 = arith.constant 0 : index
      %33 = vector.load %arg5[%c0_20, %c0_21] : memref<8x1xi32, #tpu.memory_space<vmem>>, vector<8x1xi32>
      tpu.vector_store %arg5[%c0_20, %c0_21], %32 {strides = array<i32>} : memref<8x1xi32, #tpu.memory_space<vmem>>, vector<8x1xi32>,
    } else {
    }
    return
  }
  func.func @transform_0(%arg0: i32, %arg1: i32) -> (i32, i32) {
    %c0_i32 = arith.constant 0 : i32
    %c0_i32_0 = arith.constant 0 : i32
    return %arg0, %c0_i32 : i32, i32
  }
  func.func @transform_1(%arg0: i32, %arg1: i32) -> (i32, i32) {
    %c0_i32 = arith.constant 0 : i32
    %c0_i32_0 = arith.constant 0 : i32
    return %c0_i32, %arg1 : i32, i32
  }
  func.func @transform_2(%arg0: i32, %arg1: i32) -> (i32, i32) {
    %c0_i32 = arith.constant 0 : i32
    %c0_i32_0 = arith.constant 0 : i32
    return %c0_i32, %arg1 : i32, i32
  }
  func.func @transform_3(%arg0: i32, %arg1: i32) -> (i32, i32) {
    %c0_i32 = arith.constant 0 : i32
    %c0_i32_0 = arith.constant 0 : i32
    return %arg0, %c0_i32 : i32, i32
  }
}

</mosaic_0001>

<llo_original>
// kernel: tpu_custom_call.1
$region0: #{tpu_custom_call.1}
  #allocation0 [shape = 'u32[]', space=smem, size = 0x4, offset = 0x4, fixed_abs, tag = 'smem constant byte address 0x4 - core index']
  #allocation1 [shape = 'u32[72,128]{1,0:T(1,128)}', space=vmem, size = 0x9000, scoped, tag = 'internal scratch']
  #allocation2 [shape = 'f32[8,1]{1,0:T(8,128)}', space=vmem, size = 0x1000, scoped, tag = 'scratch operand']
  %s0 = inlined_call_operand.hbm [shape: f32[8,64], index: 0, kind: input, shape index: {}]
  %s1 = inlined_call_operand.hbm [shape: f32[64,128], index: 1, kind: input, shape index: {}]
  %s2 = inlined_call_operand.vmem [shape: f32[1,128], index: 2, kind: input, shape index: {}]
  %s3 = inlined_call_operand.vmem [shape: s32[8,1], index: 3, kind: output, shape index: {}]
  %s4 = sld [smem:[#allocation0]]
  $region38: #{tpu_custom_call.1} parent=0
    _
  %s6 = ssub.s32 1, %s4
  %s7 = scalar_select 0, %s6, %s4
  $region1: #{tpu_custom_call.1} parent=0
    #allocation3 [shape = 'u8[4096]{0}', space=vmem, size = 0x1000, scoped, tag = 'input window, operand 0, single buffered']
    #allocation4 [shape = 's32[1]{0}', space=sflag, size = 0x4, scoped, tag = 'scoped memory for tpu_custom_call.1']
    #allocation5 [shape = 'u8[32768]{0}', space=vmem, size = 0x8000, scoped, tag = 'input window, operand 1, single buffered']
    #allocation6 [shape = 's32[1]{0}', space=sflag, size = 0x4, scoped, tag = 'scoped memory for tpu_custom_call.1']
    %8 = vsyncpa [#allocation4], 0
    %9 = vsyncpa [#allocation6], 0
    // Predicated region
    $region2: #{tpu_custom_call.1} parent=1 // pred_check
      _
    $region3: #{tpu_custom_call.1} parent=1 // pred_check_branch
      %11 = sbr.rel (0) target = $region5
    $region4: #{tpu_custom_call.1} parent=1 // pred_region
      %13 = vsyncadd [#allocation4], 0
      %s15 = sshll.u32 %s0, 4
      %s16 = int_to_ptr.hbm [resolvable:$true] %s15
      %s17 = sshll.u32 [#allocation3], 4
      %s18 = int_to_ptr.vmem [resolvable:$true] %s17
      %20 = dma.hbm_to_vmem [thread:$0]  %s16, 128, %s18, [#allocation4]
    $region5: #{tpu_custom_call.1} parent=1 // pred_fallthru
      _
    // Predicated region
    $region6: #{tpu_custom_call.1} parent=1 // pred_check
      _
    $region7: #{tpu_custom_call.1} parent=1 // pred_check_branch
      %22 = sbr.rel (0) target = $region9
    $region8: #{tpu_custom_call.1} parent=1 // pred_region
      %24 = vsyncadd [#allocation6], 0
      %s25 = sshll.u32 %s1, 4
      %s26 = int_to_ptr.hbm [resolvable:$true] %s25
      %s27 = sshll.u32 [#allocation5], 4
      %s28 = int_to_ptr.vmem [resolvable:$true] %s27
      %33 = dma.hbm_to_vmem [thread:$0]  %s26, 1024, %s28, [#allocation6], 128, 128, 8
    $region9: #{tpu_custom_call.1} parent=1 // pred_fallthru
      _
    // Predicated region
    $region10: #{tpu_custom_call.1} parent=1 // pred_check
      _
    $region11: #{tpu_custom_call.1} parent=1 // pred_check_branch
      %35 = sbr.rel (0) target = $region13
    $region12: #{tpu_custom_call.1} parent=1 // pred_region
      _
    $region13: #{tpu_custom_call.1} parent=1 // pred_fallthru
      _
    // Predicated region
    $region14: #{tpu_custom_call.1} parent=1 // pred_check
      _
    $region15: #{tpu_custom_call.1} parent=1 // pred_check_branch
      %37 = sbr.rel (0) target = $region17
    $region16: #{tpu_custom_call.1} parent=1 // pred_region
      %39 = dma.done [#allocation4], 128
    $region17: #{tpu_custom_call.1} parent=1 // pred_fallthru
      _
    // Predicated region
    $region18: #{tpu_custom_call.1} parent=1 // pred_check
      _
    $region19: #{tpu_custom_call.1} parent=1 // pred_check_branch
      %41 = sbr.rel (0) target = $region21
    $region20: #{tpu_custom_call.1} parent=1 // pred_region
      %43 = dma.done [#allocation6], 1024
    $region21: #{tpu_custom_call.1} parent=1 // pred_fallthru
      _
    %v44 = vld [vmem:[#allocation3] sm:$0xff]
    %v45 = vld [vmem:[#allocation5] sm:$0xff]
    %v46 = vld [vmem:[#allocation5 + $0x8] sm:$0xff]
    %v47 = vld [vmem:[#allocation5 + $0x10] sm:$0xff]
    %v48 = vld [vmem:[#allocation5 + $0x18] sm:$0xff]
    %v49 = vld [vmem:[#allocation5 + $0x20] sm:$0xff]
    %v50 = vld [vmem:[#allocation5 + $0x28] sm:$0xff]
    %v51 = vld [vmem:[#allocation5 + $0x30] sm:$0xff]
    %v52 = vld [vmem:[#allocation5 + $0x38] sm:$0xff]
    %vm53 = vcmask 523264
    %v55 = vsel %vm53, %v44, 0
    %57 = vmatpush.msra.mxu0 0.0
    %58 = vmatpush.msra.mxu0 0.0
    %59 = vmatpush.msra.mxu0 0.0
    %60 = vmatpush.msra.mxu0 0.0
    %61 = vmatpush.msra.mxu0 0.0
    %62 = vmatpush.msra.mxu0 0.0
    %63 = vmatpush.msra.mxu0 0.0
    %64 = vmatpush.msra.mxu0 0.0
    %65 = vmatpush.msra.mxu0 %v52
    %66 = vmatpush.msra.mxu0 %v51
    %67 = vmatpush.msra.mxu0 %v50
    %68 = vmatpush.msra.mxu0 %v49
    %69 = vmatpush.msra.mxu0 %v48
    %70 = vmatpush.msra.mxu0 %v47
    %71 = vmatpush.msra.mxu0 %v46
    %72 = vmatpush.msra.mxu0 %v45
    %73 = vmatmul.f32.gmra.mxu0 %v55
    %v74 = vpop.f32.mrf.mxu0
    %v75 = vadd.f32 0.0, %v74
    %76 = vdwg.mxu0
    %v77 = vld [vmem:[%s2] sm:$0x1]
    %v78 = vmul.f32 %v75, 2.0
    %v80 = vperm.slane %v77, 0
    %v82 = vsub.f32 %v80, %v78
    %83 = vmin.xlane.f32.xlu0 %v82
    %v84 = vpop.xlane.xlu0 %83
    %v85 = vlaneseq
    %v86 = vand.u32 %v85, 127
    %vm87 = vcmp.eq.f32.partialorder %v82, %v84
    %v88 = vsel %vm87, %v86, 128
    %v89 = vand.u32 %v88, 65535
    %v90 = vshra.s32 %v88, 16
    %v91 = vcvt.s32.f32 %v89
    %v92 = vcvt.s32.f32 %v90
    %93 = vmin.xlane.f32.xlu0 %v92
    %v94 = vpop.xlane.xlu0 %93
    %vm95 = vcmp.eq.f32.partialorder %v92, %v94
    %v96 = vsel %vm95, %v91, inf
    %97 = vmin.xlane.f32.xlu0 %v96
    %v98 = vpop.xlane.xlu0 %97
    %v99 = vcvt.f32.s32 %v98
    %v100 = vcvt.f32.s32 %v94
    %v101 = vshll.u32 %v100, 16
    %v102 = vadd.s32 %v101, %v99
    %s103 = smul.u32 0, 128
    %v104 = vstv %s103
    %v105 = vadd.s32 %v102, %v104
    %p106 = scmp.eq.s32.totalorder 0, 0
    // Predicated region
    $region22: #{tpu_custom_call.1} parent=1 // pred_check
      %p107 = pneg %p106
    $region23: #{tpu_custom_call.1} parent=1 // pred_check_branch
      %109 = sbr.rel (%p107) target = $region25
    $region24: #{tpu_custom_call.1} parent=1 // pred_region
      %vm110 = vcmask 7168
      %111 = vst.msk [vmem:[#allocation2] sm:$0xff] %vm110, %v84
      %112 = vst.msk [vmem:[%s3] sm:$0xff] %vm110, %v105
    $region25: #{tpu_custom_call.1} parent=1 // pred_fallthru
      _
    %p113 = scmp.gt.s32.totalorder 0, 0
    // Predicated region
    $region26: #{tpu_custom_call.1} parent=1 // pred_check
      %p114 = pneg %p113
    $region27: #{tpu_custom_call.1} parent=1 // pred_check_branch
      %116 = sbr.rel (%p114) target = $region29
    $region28: #{tpu_custom_call.1} parent=1 // pred_region
      %v117 = vld [vmem:[#allocation2] sm:$0xff]
      %vm118 = vcmp.lt.f32.partialorder %v84, %v117
      %v119 = vsel %vm118, %v84, %v117
      %vm120 = vcmask 7168
      %121 = vst.msk [vmem:[#allocation2] sm:$0xff] %vm120, %v119
      %v122 = vld [vmem:[%s3] sm:$0xff]
      %v123 = vsel %vm118, %v105, %v122
      %124 = vst.msk [vmem:[%s3] sm:$0xff] %vm120, %v123
    $region29: #{tpu_custom_call.1} parent=1 // pred_fallthru
      _
    // Predicated region
    $region30: #{tpu_custom_call.1} parent=1 // pred_check
      _
    $region31: #{tpu_custom_call.1} parent=1 // pred_check_branch
      %126 = sbr.rel (0) target = $region33
    $region32: #{tpu_custom_call.1} parent=1 // pred_region
      _
    $region33: #{tpu_custom_call.1} parent=1 // pred_fallthru
      _
    // Predicated region
    $region34: #{tpu_custom_call.1} parent=1 // pred_check
      _
    $region35: #{tpu_custom_call.1} parent=1 // pred_check_branch
      %128 = sbr.rel (0) target = $region37
    $region36: #{tpu_custom_call.1} parent=1 // pred_region
      _
    $region37: #{tpu_custom_call.1} parent=1 // pred_fallthru
      _
    %129 = vsyncpa [#allocation4], 1
    %130 = vsyncpa [#allocation6], 1

</llo_original>
